<compile_context>
chip_gen: v6e
topology: v6e:2x2x1
jax: 0.10.0
libtpu: 0.0.40
codegen_flags: <defaults>
</compile_context>

<pallas_src>
import jax
import jax.numpy as jnp
from jax import lax
from jax.experimental import pallas as pl
from jax.experimental.pallas import tpu as pltpu  # noqa: F401  (TPU backend assumed)

# Small synthetic hyper-parameters consistent with an encoder transformer.
VOCAB = 128                   # lane-aligned so the fused one-hot gather matmul is dense
SEQ = 8
HIDDEN = 32
NUM_HEADS = 2
HEAD_DIM = HIDDEN // NUM_HEADS
FFN = 64
EPS = 1e-5
_SCALE = 1.0 / float(HEAD_DIM) ** 0.5
LANE_PACK = 128 // HIDDEN     # tokens packed per lane-dense output row
NEG_INF = -1e9


def _gelu(x):
    # tanh approximation of GELU (EUP tanh + VPU mul/add).
    # TODO(synk): PyTorch nn.GELU defaults to the exact erf form.
    return 0.5 * x * (1.0 + jnp.tanh(0.7978845608028654 * (x + 0.044715 * x * x * x)))


def _layernorm(x, g, b):
    mu = jnp.mean(x, axis=-1, keepdims=True)
    var = jnp.mean((x - mu) ** 2, axis=-1, keepdims=True)
    return (x - mu) * lax.rsqrt(var + EPS) * g + b


def encoder_layer_kernel(ids_ref, mask_ref, tok_ref, pos_ref,
                         wqkv_ref, wo_ref, w1_ref, w2_ref, bias_ref,
                         out_ref):
    """Fused embedding + transformer-encoder layer over all B*S tokens."""
    T = ids_ref.shape[0]              # flattened tokens = B * SEQ (static)
    B = T // SEQ
    RPG = T // LANE_PACK              # rows per lane-dense output group

    # ---- Packed (8, 128) bias / LayerNorm slab: one operand instead of seven.
    slab = bias_ref[...]
    bqkv = slab[0:1, 0:3 * HIDDEN]
    bo   = slab[1:2, 0:HIDDEN]
    ln1g = slab[2:3, 0:HIDDEN]
    ln1b = slab[3:4, 0:HIDDEN]
    b1   = slab[4:5, 0:FFN]
    b2   = slab[5:6, 0:HIDDEN]
    ln2g = slab[6:7, 0:HIDDEN]
    ln2b = slab[7:8, 0:HIDDEN]

    # ---- Fused token-embedding gather (one-hot matmul on the MXU) + pos add.
    ids = ids_ref[...]                                                  # (T, 1) int32
    onehot = (lax.broadcasted_iota(jnp.int32, (T, VOCAB), 1) == ids)
    x = jnp.dot(onehot.astype(jnp.bfloat16), tok_ref[...].astype(jnp.bfloat16),
                preferred_element_type=jnp.float32)                     # (T, H) f32
    x = x + jnp.concatenate([pos_ref[...]] * B, axis=0)                 # residual path, f32

    # ---- Fused QKV projection (1/sqrt(HEAD_DIM) pre-folded into the Q block).
    qkv = jnp.dot(x.astype(jnp.bfloat16), wqkv_ref[...],
                  preferred_element_type=jnp.float32) + bqkv            # (T, 3H) f32
    q = qkv[:, 0:HIDDEN]
    k = qkv[:, HIDDEN:2 * HIDDEN].astype(jnp.bfloat16)
    v = qkv[:, 2 * HIDDEN:3 * HIDDEN]

    # (T, T) additive mask: block-diagonal over batches + key padding.
    add_mask = mask_ref[...]

    # ---- Multi-head attention.  Heads are selected with lane masks (VPU
    #      multiplies) instead of sub-128-lane slices + stacks; ctx lands
    #      directly in the concatenated (T, NUM_HEADS*HEAD_DIM) layout.
    lane = lax.broadcasted_iota(jnp.int32, (1, HIDDEN), 1)              # hoisted
    ctx = jnp.zeros((T, HIDDEN), jnp.float32)
    for h in range(NUM_HEADS):        # static unroll (NUM_HEADS is tiny)
        hm = ((lane >= h * HEAD_DIM) & (lane < (h + 1) * HEAD_DIM)).astype(jnp.float32)
        qh = (q * hm).astype(jnp.bfloat16)       # other-head lanes zeroed
        s = lax.dot_general(qh, k, (((1,), (1,)), ((), ())),
                            preferred_element_type=jnp.float32) + add_mask   # (T, T)
        m = jnp.max(s, axis=-1, keepdims=True)
        p = jnp.exp(s - m)
        p = p * pl.reciprocal(jnp.sum(p, axis=-1, keepdims=True), approx=True)
        vh = (v * hm).astype(jnp.bfloat16)       # only head-h lanes contribute to ctx
        ctx = ctx + jnp.dot(p.astype(jnp.bfloat16), vh,
                            preferred_element_type=jnp.float32)

    # ---- Single output projection (T, H) @ (H, H); no per-head loop/concats.
    attn = jnp.dot(ctx.astype(jnp.bfloat16), wo_ref[...],
                   preferred_element_type=jnp.float32) + bo

    # ---- Residual + LayerNorm 1 (dropout == identity at inference).
    h1 = _layernorm(x + attn, ln1g, ln1b)

    # ---- Feed-forward (bf16 MXU operands, f32 elementwise / GELU).
    f = jnp.dot(h1.astype(jnp.bfloat16), w1_ref[...],
                preferred_element_type=jnp.float32) + b1
    f = _gelu(f)
    f = jnp.dot(f.astype(jnp.bfloat16), w2_ref[...],
                preferred_element_type=jnp.float32) + b2

    # ---- Residual + LayerNorm 2.
    h2 = _layernorm(h1 + f, ln2g, ln2b)                                  # (T, H)

    # ---- Lane-dense store: pack LANE_PACK groups of rows along lanes so the
    #      output last dim is 128 (unmasked vst); wrapper undoes the packing.
    out_ref[...] = jnp.concatenate(
        [h2[g * RPG:(g + 1) * RPG, :] for g in range(LANE_PACK)],
        axis=1).astype(out_ref.dtype)


def encoder_model_forward(params, inputs):
    """JAX wrapper mirroring EncoderModel.forward(inputs) -> outputs."""
    input_ids = inputs["input_ids"]
    attention_mask = inputs["attention_mask"]
    B, S = input_ids.shape
    T = B * S
    assert S == SEQ and 128 % HIDDEN == 0 and T % LANE_PACK == 0

    ids = input_ids.reshape(T, 1).astype(jnp.int32)

    # One (T, T) additive mask: same-batch block-diagonal + key padding.
    # No per-head duplication (single small operand).
    keyok = attention_mask.reshape(T).astype(jnp.float32) > 0.5
    bid = jnp.repeat(jnp.arange(B, dtype=jnp.int32), S)
    same_batch = bid[:, None] == bid[None, :]
    add_mask = jnp.where(same_batch & keyok[None, :], 0.0, NEG_INF).astype(jnp.float32)

    out = pl.pallas_call(
        encoder_layer_kernel,
        out_shape=jax.ShapeDtypeStruct((T // LANE_PACK, LANE_PACK * HIDDEN), jnp.float32),
    )(ids, add_mask,
      params["tok_emb"], params["pos_emb"],
      params["wqkv"], params["wo"], params["w1"], params["w2"],
      params["bias_slab"])

    # Undo the lane-dense packing (wrapper-side layout plumbing only).
    out = out.reshape(T // LANE_PACK, LANE_PACK, HIDDEN)
    out = jnp.transpose(out, (1, 0, 2)).reshape(B, S, HIDDEN)
    return out


def encoder_reference(params, inputs):
    """Pure-JAX reference of the same stand-in encoder (f32 math)."""
    ids = inputs["input_ids"]
    am = inputs["attention_mask"].astype(jnp.float32)
    B, S = ids.shape
    slab = params["bias_slab"]
    bqkv, bo = slab[0, :3 * HIDDEN], slab[1, :HIDDEN]
    ln1g, ln1b = slab[2, :HIDDEN], slab[3, :HIDDEN]
    b1, b2 = slab[4, :FFN], slab[5, :HIDDEN]
    ln2g, ln2b = slab[6, :HIDDEN], slab[7, :HIDDEN]

    x = params["tok_emb"][ids] + params["pos_emb"][None, :S, :]          # (B, S, H)
    qkv = x @ params["wqkv"].astype(jnp.float32) + bqkv
    q, k, v = jnp.split(qkv, 3, axis=-1)

    def heads(t):
        return t.reshape(B, S, NUM_HEADS, HEAD_DIM).transpose(0, 2, 1, 3)

    q, k, v = heads(q), heads(k), heads(v)
    scores = q @ k.transpose(0, 1, 3, 2)            # scale already folded into wqkv
    scores = scores + jnp.where(am[:, None, None, :] > 0.5, 0.0, NEG_INF)
    p = jax.nn.softmax(scores, axis=-1)
    ctx = (p @ v).transpose(0, 2, 1, 3).reshape(B, S, HIDDEN)
    attn = ctx @ params["wo"].astype(jnp.float32) + bo
    h1 = _layernorm(x + attn, ln1g, ln1b)
    f = _gelu(h1 @ params["w1"].astype(jnp.float32) + b1)
    f = f @ params["w2"].astype(jnp.float32) + b2
    return _layernorm(h1 + f, ln2g, ln2b)


def init_params(key):
    ks = jax.random.split(key, 6)

    def w(k, shape, scale=0.02):
        return scale * jax.random.normal(k, shape, jnp.float32)

    wqkv = w(ks[2], (HIDDEN, 3 * HIDDEN))
    bqkv = jnp.zeros((3 * HIDDEN,), jnp.float32)
    # Fold the 1/sqrt(HEAD_DIM) attention scale into the Q projection
    # (weights + bias) so the kernel never multiplies the scores tensor.
    wqkv = wqkv.at[:, :HIDDEN].multiply(_SCALE)
    bqkv = bqkv.at[:HIDDEN].multiply(_SCALE)

    def row128(vec):
        return jnp.pad(vec, (0, 128 - vec.shape[0]))

    # Seven tiny bias / LayerNorm vectors packed into one (8, 128) slab.
    bias_slab = jnp.stack([
        row128(bqkv),                                  # row 0: qkv bias (96 used)
        row128(jnp.zeros((HIDDEN,), jnp.float32)),     # row 1: attn-out bias
        row128(jnp.ones((HIDDEN,), jnp.float32)),      # row 2: ln1 gamma
        row128(jnp.zeros((HIDDEN,), jnp.float32)),     # row 3: ln1 beta
        row128(jnp.zeros((FFN,), jnp.float32)),        # row 4: ffn bias 1 (64 used)
        row128(jnp.zeros((HIDDEN,), jnp.float32)),     # row 5: ffn bias 2
        row128(jnp.ones((HIDDEN,), jnp.float32)),      # row 6: ln2 gamma
        row128(jnp.zeros((HIDDEN,), jnp.float32)),     # row 7: ln2 beta
    ], axis=0).astype(jnp.float32)

    return {
        "tok_emb": w(ks[0], (VOCAB, HIDDEN)),          # f32 (cast to bf16 in-kernel)
        "pos_emb": w(ks[1], (SEQ, HIDDEN)),            # f32
        "wqkv": wqkv.astype(jnp.bfloat16),             # MXU weights in bf16
        "wo": w(ks[3], (HIDDEN, HIDDEN)).astype(jnp.bfloat16),
        "w1": w(ks[4], (HIDDEN, FFN)).astype(jnp.bfloat16),
        "w2": w(ks[5], (FFN, HIDDEN)).astype(jnp.bfloat16),
        "bias_slab": bias_slab,
    }


if __name__ == "__main__":
    key = jax.random.PRNGKey(0)
    pkey, ikey = jax.random.split(key)

    params = init_params(pkey)

    B = 2
    input_ids = jax.random.randint(ikey, (B, SEQ), 0, VOCAB, dtype=jnp.int32)
    attention_mask = jnp.array(
        [[1, 1, 1, 1, 1, 1, 1, 1],
         [1, 1, 1, 1, 1, 1, 0, 0]], dtype=jnp.int32)   # second example padded

    inputs = {"input_ids": input_ids, "attention_mask": attention_mask}

    out = encoder_model_forward(params, inputs)
    out = jax.block_until_ready(out)

    assert out.shape == (B, SEQ, HIDDEN)
    assert bool(jnp.all(jnp.isfinite(out)))

    # Loose-tolerance check vs. a pure-JAX f32 reference (bf16 MXU operands and
    # the approx reciprocal introduce ~1e-3-level deviations by design).
    ref = encoder_reference(params, inputs)
    max_err = float(jnp.max(jnp.abs(out - ref)))
    assert max_err < 5e-2, f"max abs error {max_err}"

    print("KERNEL_OK")
</pallas_src>

<mosaic_0001>
module attributes {stable_mosaic.version = 11 : i64} {
  func.func @encoder_layer_kernel(%arg0: memref<16x1xi32, #tpu.memory_space<vmem>>, %arg1: memref<16x16xf32, #tpu.memory_space<vmem>>, %arg2: memref<128x32xf32, #tpu.memory_space<vmem>>, %arg3: memref<8x32xf32, #tpu.memory_space<vmem>>, %arg4: memref<32x96xbf16, #tpu.memory_space<vmem>>, %arg5: memref<32x32xbf16, #tpu.memory_space<vmem>>, %arg6: memref<32x64xbf16, #tpu.memory_space<vmem>>, %arg7: memref<64x32xbf16, #tpu.memory_space<vmem>>, %arg8: memref<8x128xf32, #tpu.memory_space<vmem>>, %arg9: memref<4x128xf32, #tpu.memory_space<vmem>>) attributes {dimension_semantics = [], scalar_prefetch = 0 : i64, scratch_operands = 0 : i64, tpu.core_type = #tpu.core_type<tc>} {
    %c0 = arith.constant 0 : index
    %c0_0 = arith.constant 0 : index
    %0 = vector.load %arg8[%c0, %c0_0] : memref<8x128xf32, #tpu.memory_space<vmem>>, vector<8x128xf32>
    %1 = vector.extract_strided_slice %0 {offsets = [0, 0], sizes = [1, 96], strides = [1, 1]} : vector<8x128xf32> to vector<1x96xf32>
    %2 = vector.extract_strided_slice %0 {offsets = [1, 0], sizes = [1, 32], strides = [1, 1]} : vector<8x128xf32> to vector<1x32xf32>
    %3 = vector.extract_strided_slice %0 {offsets = [2, 0], sizes = [1, 32], strides = [1, 1]} : vector<8x128xf32> to vector<1x32xf32>
    %4 = vector.extract_strided_slice %0 {offsets = [3, 0], sizes = [1, 32], strides = [1, 1]} : vector<8x128xf32> to vector<1x32xf32>
    %5 = vector.extract_strided_slice %0 {offsets = [4, 0], sizes = [1, 64], strides = [1, 1]} : vector<8x128xf32> to vector<1x64xf32>
    %6 = vector.extract_strided_slice %0 {offsets = [5, 0], sizes = [1, 32], strides = [1, 1]} : vector<8x128xf32> to vector<1x32xf32>
    %7 = vector.extract_strided_slice %0 {offsets = [6, 0], sizes = [1, 32], strides = [1, 1]} : vector<8x128xf32> to vector<1x32xf32>
    %8 = vector.extract_strided_slice %0 {offsets = [7, 0], sizes = [1, 32], strides = [1, 1]} : vector<8x128xf32> to vector<1x32xf32>
    %c0_1 = arith.constant 0 : index
    %c0_2 = arith.constant 0 : index
    %9 = vector.load %arg0[%c0_1, %c0_2] : memref<16x1xi32, #tpu.memory_space<vmem>>, vector<16x1xi32>
    %10 = tpu.iota {dimensions = array<i32: 1>} : vector<16x128xi32>
    %11 = vector.broadcast %9 : vector<16x1xi32> to vector<16x128xi32>
    %12 = arith.cmpi eq, %10, %11 : vector<16x128xi32>
    %13 = arith.extui %12 : vector<16x128xi1> to vector<16x128xi32>
    %14 = arith.sitofp %13 : vector<16x128xi32> to vector<16x128xf32>
    %15 = arith.truncf %14 : vector<16x128xf32> to vector<16x128xbf16>
    %c0_3 = arith.constant 0 : index
    %c0_4 = arith.constant 0 : index
    %16 = vector.load %arg2[%c0_3, %c0_4] : memref<128x32xf32, #tpu.memory_space<vmem>>, vector<128x32xf32>
    %17 = arith.truncf %16 : vector<128x32xf32> to vector<128x32xbf16>
    %cst = arith.constant dense<0.000000e+00> : vector<16x32xf32>
    %18 = tpu.matmul %15, %17, %cst {dimension_numbers = #tpu.dot_dimension_numbers<[1], [0], [0], [1], [0, 0, 1, 1], [], []>} : vector<16x128xbf16>, vector<128x32xbf16>, vector<16x32xf32> -> vector<16x32xf32>
    %c0_5 = arith.constant 0 : index
    %c0_6 = arith.constant 0 : index
    %19 = vector.load %arg3[%c0_5, %c0_6] : memref<8x32xf32, #tpu.memory_space<vmem>>, vector<8x32xf32>
    %20 = tpu.concatenate %19, %19 in 0 : vector<8x32xf32>, vector<8x32xf32> -> vector<16x32xf32>
    %21 = arith.addf %18, %20 : vector<16x32xf32>
    %22 = arith.truncf %21 : vector<16x32xf32> to vector<16x32xbf16>
    %c0_7 = arith.constant 0 : index
    %c0_8 = arith.constant 0 : index
    %23 = vector.load %arg4[%c0_7, %c0_8] : memref<32x96xbf16, #tpu.memory_space<vmem>>, vector<32x96xbf16>
    %cst_9 = arith.constant dense<0.000000e+00> : vector<16x96xf32>
    %24 = tpu.matmul %22, %23, %cst_9 {dimension_numbers = #tpu.dot_dimension_numbers<[1], [0], [0], [1], [0, 0, 1, 1], [], []>} : vector<16x32xbf16>, vector<32x96xbf16>, vector<16x96xf32> -> vector<16x96xf32>
    %25 = vector.broadcast %1 : vector<1x96xf32> to vector<16x96xf32>
    %26 = arith.addf %24, %25 : vector<16x96xf32>
    %27 = vector.extract_strided_slice %26 {offsets = [0, 0], sizes = [16, 32], strides = [1, 1]} : vector<16x96xf32> to vector<16x32xf32>
    %28 = vector.extract_strided_slice %26 {offsets = [0, 32], sizes = [16, 32], strides = [1, 1]} : vector<16x96xf32> to vector<16x32xf32>
    %29 = arith.truncf %28 : vector<16x32xf32> to vector<16x32xbf16>
    %30 = vector.extract_strided_slice %26 {offsets = [0, 64], sizes = [16, 32], strides = [1, 1]} : vector<16x96xf32> to vector<16x32xf32>
    %c0_10 = arith.constant 0 : index
    %c0_11 = arith.constant 0 : index
    %31 = vector.load %arg1[%c0_10, %c0_11] : memref<16x16xf32, #tpu.memory_space<vmem>>, vector<16x16xf32>
    %32 = tpu.iota {dimensions = array<i32: 1>} : vector<1x32xi32>
    %cst_12 = arith.constant 0.000000e+00 : f32
    %33 = vector.broadcast %cst_12 : f32 to vector<16x32xf32>
    %c0_i32 = arith.constant 0 : i32
    %34 = vector.broadcast %c0_i32 : i32 to vector<1x32xi32>
    %35 = arith.cmpi sge, %32, %34 : vector<1x32xi32>
    %c16_i32 = arith.constant 16 : i32
    %36 = vector.broadcast %c16_i32 : i32 to vector<1x32xi32>
    %37 = arith.cmpi slt, %32, %36 : vector<1x32xi32>
    %38 = arith.andi %35, %37 : vector<1x32xi1>
    %39 = arith.extui %38 : vector<1x32xi1> to vector<1x32xi32>
    %40 = arith.sitofp %39 : vector<1x32xi32> to vector<1x32xf32>
    %41 = vector.broadcast %40 : vector<1x32xf32> to vector<16x32xf32>
    %42 = arith.mulf %27, %41 : vector<16x32xf32>
    %43 = arith.truncf %42 : vector<16x32xf32> to vector<16x32xbf16>
    %cst_13 = arith.constant dense<0.000000e+00> : vector<16x16xf32>
    %44 = tpu.matmul %43, %29, %cst_13 {dimension_numbers = #tpu.dot_dimension_numbers<[1], [1], [0], [0], [0, 0, 1, 0], [], []>} : vector<16x32xbf16>, vector<16x32xbf16>, vector<16x16xf32> -> vector<16x16xf32>
    %45 = arith.addf %44, %31 : vector<16x16xf32>
    %cst_14 = arith.constant dense<0xFF800000> : vector<16xf32>
    %46 = vector.multi_reduction <maximumf>, %45, %cst_14 [1] : vector<16x16xf32> to vector<16xf32>
    %47 = vector.shape_cast %46 : vector<16xf32> to vector<16x1xf32>
    %48 = vector.broadcast %47 : vector<16x1xf32> to vector<16x16xf32>
    %49 = arith.subf %45, %48 : vector<16x16xf32>
    %50 = math.exp %49 : vector<16x16xf32>
    %cst_15 = arith.constant dense<0.000000e+00> : vector<16xf32>
    %51 = vector.multi_reduction <add>, %50, %cst_15 [1] : vector<16x16xf32> to vector<16xf32>
    %52 = vector.shape_cast %51 : vector<16xf32> to vector<16x1xf32>
    %53 = tpu.reciprocal %52 {approx = true} : vector<16x1xf32> -> vector<16x1xf32>
    %54 = vector.broadcast %53 : vector<16x1xf32> to vector<16x16xf32>
    %55 = arith.mulf %50, %54 : vector<16x16xf32>
    %56 = vector.broadcast %40 : vector<1x32xf32> to vector<16x32xf32>
    %57 = arith.mulf %30, %56 : vector<16x32xf32>
    %58 = arith.truncf %57 : vector<16x32xf32> to vector<16x32xbf16>
    %59 = arith.truncf %55 : vector<16x16xf32> to vector<16x16xbf16>
    %cst_16 = arith.constant dense<0.000000e+00> : vector<16x32xf32>
    %60 = tpu.matmul %59, %58, %cst_16 {dimension_numbers = #tpu.dot_dimension_numbers<[1], [0], [0], [1], [0, 0, 1, 1], [], []>} : vector<16x16xbf16>, vector<16x32xbf16>, vector<16x32xf32> -> vector<16x32xf32>
    %61 = arith.addf %33, %60 : vector<16x32xf32>
    %c16_i32_17 = arith.constant 16 : i32
    %62 = vector.broadcast %c16_i32_17 : i32 to vector<1x32xi32>
    %63 = arith.cmpi sge, %32, %62 : vector<1x32xi32>
    %c32_i32 = arith.constant 32 : i32
    %64 = vector.broadcast %c32_i32 : i32 to vector<1x32xi32>
    %65 = arith.cmpi slt, %32, %64 : vector<1x32xi32>
    %66 = arith.andi %63, %65 : vector<1x32xi1>
    %67 = arith.extui %66 : vector<1x32xi1> to vector<1x32xi32>
    %68 = arith.sitofp %67 : vector<1x32xi32> to vector<1x32xf32>
    %69 = vector.broadcast %68 : vector<1x32xf32> to vector<16x32xf32>
    %70 = arith.mulf %27, %69 : vector<16x32xf32>
    %71 = arith.truncf %70 : vector<16x32xf32> to vector<16x32xbf16>
    %cst_18 = arith.constant dense<0.000000e+00> : vector<16x16xf32>
    %72 = tpu.matmul %71, %29, %cst_18 {dimension_numbers = #tpu.dot_dimension_numbers<[1], [1], [0], [0], [0, 0, 1, 0], [], []>} : vector<16x32xbf16>, vector<16x32xbf16>, vector<16x16xf32> -> vector<16x16xf32>
    %73 = arith.addf %72, %31 : vector<16x16xf32>
    %cst_19 = arith.constant dense<0xFF800000> : vector<16xf32>
    %74 = vector.multi_reduction <maximumf>, %73, %cst_19 [1] : vector<16x16xf32> to vector<16xf32>
    %75 = vector.shape_cast %74 : vector<16xf32> to vector<16x1xf32>
    %76 = vector.broadcast %75 : vector<16x1xf32> to vector<16x16xf32>
    %77 = arith.subf %73, %76 : vector<16x16xf32>
    %78 = math.exp %77 : vector<16x16xf32>
    %cst_20 = arith.constant dense<0.000000e+00> : vector<16xf32>
    %79 = vector.multi_reduction <add>, %78, %cst_20 [1] : vector<16x16xf32> to vector<16xf32>
    %80 = vector.shape_cast %79 : vector<16xf32> to vector<16x1xf32>
    %81 = tpu.reciprocal %80 {approx = true} : vector<16x1xf32> -> vector<16x1xf32>
    %82 = vector.broadcast %81 : vector<16x1xf32> to vector<16x16xf32>
    %83 = arith.mulf %78, %82 : vector<16x16xf32>
    %84 = vector.broadcast %68 : vector<1x32xf32> to vector<16x32xf32>
    %85 = arith.mulf %30, %84 : vector<16x32xf32>
    %86 = arith.truncf %85 : vector<16x32xf32> to vector<16x32xbf16>
    %87 = arith.truncf %83 : vector<16x16xf32> to vector<16x16xbf16>
    %cst_21 = arith.constant dense<0.000000e+00> : vector<16x32xf32>
    %88 = tpu.matmul %87, %86, %cst_21 {dimension_numbers = #tpu.dot_dimension_numbers<[1], [0], [0], [1], [0, 0, 1, 1], [], []>} : vector<16x16xbf16>, vector<16x32xbf16>, vector<16x32xf32> -> vector<16x32xf32>
    %89 = arith.addf %61, %88 : vector<16x32xf32>
    %90 = arith.truncf %89 : vector<16x32xf32> to vector<16x32xbf16>
    %c0_22 = arith.constant 0 : index
    %c0_23 = arith.constant 0 : index
    %91 = vector.load %arg5[%c0_22, %c0_23] : memref<32x32xbf16, #tpu.memory_space<vmem>>, vector<32x32xbf16>
    %cst_24 = arith.constant dense<0.000000e+00> : vector<16x32xf32>
    %92 = tpu.matmul %90, %91, %cst_24 {dimension_numbers = #tpu.dot_dimension_numbers<[1], [0], [0], [1], [0, 0, 1, 1], [], []>} : vector<16x32xbf16>, vector<32x32xbf16>, vector<16x32xf32> -> vector<16x32xf32>
    %93 = vector.broadcast %2 : vector<1x32xf32> to vector<16x32xf32>
    %94 = arith.addf %92, %93 : vector<16x32xf32>
    %95 = arith.addf %21, %94 : vector<16x32xf32>
    %cst_25 = arith.constant dense<0.000000e+00> : vector<16xf32>
    %96 = vector.multi_reduction <add>, %95, %cst_25 [1] : vector<16x32xf32> to vector<16xf32>
    %97 = vector.shape_cast %96 : vector<16xf32> to vector<16x1xf32>
    %cst_26 = arith.constant 3.200000e+01 : f32
    %98 = vector.broadcast %cst_26 : f32 to vector<16x1xf32>
    %99 = arith.divf %97, %98 : vector<16x1xf32>
    %100 = vector.broadcast %99 : vector<16x1xf32> to vector<16x32xf32>
    %101 = arith.subf %95, %100 : vector<16x32xf32>
    %102 = arith.mulf %101, %101 : vector<16x32xf32>
    %cst_27 = arith.constant dense<0.000000e+00> : vector<16xf32>
    %103 = vector.multi_reduction <add>, %102, %cst_27 [1] : vector<16x32xf32> to vector<16xf32>
    %104 = vector.shape_cast %103 : vector<16xf32> to vector<16x1xf32>
    %cst_28 = arith.constant 3.200000e+01 : f32
    %105 = vector.broadcast %cst_28 : f32 to vector<16x1xf32>
    %106 = arith.divf %104, %105 : vector<16x1xf32>
    %107 = vector.broadcast %99 : vector<16x1xf32> to vector<16x32xf32>
    %108 = arith.subf %95, %107 : vector<16x32xf32>
    %cst_29 = arith.constant 9.99999974E-6 : f32
    %109 = vector.broadcast %cst_29 : f32 to vector<16x1xf32>
    %110 = arith.addf %106, %109 : vector<16x1xf32>
    %111 = math.rsqrt %110 : vector<16x1xf32>
    %112 = vector.broadcast %111 : vector<16x1xf32> to vector<16x32xf32>
    %113 = arith.mulf %108, %112 : vector<16x32xf32>
    %114 = vector.broadcast %3 : vector<1x32xf32> to vector<16x32xf32>
    %115 = arith.mulf %113, %114 : vector<16x32xf32>
    %116 = vector.broadcast %4 : vector<1x32xf32> to vector<16x32xf32>
    %117 = arith.addf %115, %116 : vector<16x32xf32>
    %118 = arith.truncf %117 : vector<16x32xf32> to vector<16x32xbf16>
    %c0_30 = arith.constant 0 : index
    %c0_31 = arith.constant 0 : index
    %119 = vector.load %arg6[%c0_30, %c0_31] : memref<32x64xbf16, #tpu.memory_space<vmem>>, vector<32x64xbf16>
    %cst_32 = arith.constant dense<0.000000e+00> : vector<16x64xf32>
    %120 = tpu.matmul %118, %119, %cst_32 {dimension_numbers = #tpu.dot_dimension_numbers<[1], [0], [0], [1], [0, 0, 1, 1], [], []>} : vector<16x32xbf16>, vector<32x64xbf16>, vector<16x64xf32> -> vector<16x64xf32>
    %121 = vector.broadcast %5 : vector<1x64xf32> to vector<16x64xf32>
    %122 = arith.addf %120, %121 : vector<16x64xf32>
    %cst_33 = arith.constant 5.000000e-01 : f32
    %123 = vector.broadcast %cst_33 : f32 to vector<16x64xf32>
    %124 = arith.mulf %123, %122 : vector<16x64xf32>
    %cst_34 = arith.constant 4.471500e-02 : f32
    %125 = vector.broadcast %cst_34 : f32 to vector<16x64xf32>
    %126 = arith.mulf %125, %122 : vector<16x64xf32>
    %127 = arith.mulf %126, %122 : vector<16x64xf32>
    %128 = arith.mulf %127, %122 : vector<16x64xf32>
    %129 = arith.addf %122, %128 : vector<16x64xf32>
    %cst_35 = arith.constant 0.797884583 : f32
    %130 = vector.broadcast %cst_35 : f32 to vector<16x64xf32>
    %131 = arith.mulf %130, %129 : vector<16x64xf32>
    %132 = math.tanh %131 : vector<16x64xf32>
    %cst_36 = arith.constant 1.000000e+00 : f32
    %133 = vector.broadcast %cst_36 : f32 to vector<16x64xf32>
    %134 = arith.addf %133, %132 : vector<16x64xf32>
    %135 = arith.mulf %124, %134 : vector<16x64xf32>
    %136 = arith.truncf %135 : vector<16x64xf32> to vector<16x64xbf16>
    %c0_37 = arith.constant 0 : index
    %c0_38 = arith.constant 0 : index
    %137 = vector.load %arg7[%c0_37, %c0_38] : memref<64x32xbf16, #tpu.memory_space<vmem>>, vector<64x32xbf16>
    %cst_39 = arith.constant dense<0.000000e+00> : vector<16x32xf32>
    %138 = tpu.matmul %136, %137, %cst_39 {dimension_numbers = #tpu.dot_dimension_numbers<[1], [0], [0], [1], [0, 0, 1, 1], [], []>} : vector<16x64xbf16>, vector<64x32xbf16>, vector<16x32xf32> -> vector<16x32xf32>
    %139 = vector.broadcast %6 : vector<1x32xf32> to vector<16x32xf32>
    %140 = arith.addf %138, %139 : vector<16x32xf32>
    %141 = arith.addf %117, %140 : vector<16x32xf32>
    %cst_40 = arith.constant dense<0.000000e+00> : vector<16xf32>
    %142 = vector.multi_reduction <add>, %141, %cst_40 [1] : vector<16x32xf32> to vector<16xf32>
    %143 = vector.shape_cast %142 : vector<16xf32> to vector<16x1xf32>
    %cst_41 = arith.constant 3.200000e+01 : f32
    %144 = vector.broadcast %cst_41 : f32 to vector<16x1xf32>
    %145 = arith.divf %143, %144 : vector<16x1xf32>
    %146 = vector.broadcast %145 : vector<16x1xf32> to vector<16x32xf32>
    %147 = arith.subf %141, %146 : vector<16x32xf32>
    %148 = arith.mulf %147, %147 : vector<16x32xf32>
    %cst_42 = arith.constant dense<0.000000e+00> : vector<16xf32>
    %149 = vector.multi_reduction <add>, %148, %cst_42 [1] : vector<16x32xf32> to vector<16xf32>
    %150 = vector.shape_cast %149 : vector<16xf32> to vector<16x1xf32>
    %cst_43 = arith.constant 3.200000e+01 : f32
    %151 = vector.broadcast %cst_43 : f32 to vector<16x1xf32>
    %152 = arith.divf %150, %151 : vector<16x1xf32>
    %153 = vector.broadcast %145 : vector<16x1xf32> to vector<16x32xf32>
    %154 = arith.subf %141, %153 : vector<16x32xf32>
    %cst_44 = arith.constant 9.99999974E-6 : f32
    %155 = vector.broadcast %cst_44 : f32 to vector<16x1xf32>
    %156 = arith.addf %152, %155 : vector<16x1xf32>
    %157 = math.rsqrt %156 : vector<16x1xf32>
    %158 = vector.broadcast %157 : vector<16x1xf32> to vector<16x32xf32>
    %159 = arith.mulf %154, %158 : vector<16x32xf32>
    %160 = vector.broadcast %7 : vector<1x32xf32> to vector<16x32xf32>
    %161 = arith.mulf %159, %160 : vector<16x32xf32>
    %162 = vector.broadcast %8 : vector<1x32xf32> to vector<16x32xf32>
    %163 = arith.addf %161, %162 : vector<16x32xf32>
    %164 = vector.extract_strided_slice %163 {offsets = [0, 0], sizes = [4, 32], strides = [1, 1]} : vector<16x32xf32> to vector<4x32xf32>
    %165 = vector.extract_strided_slice %163 {offsets = [4, 0], sizes = [4, 32], strides = [1, 1]} : vector<16x32xf32> to vector<4x32xf32>
    %166 = vector.extract_strided_slice %163 {offsets = [8, 0], sizes = [4, 32], strides = [1, 1]} : vector<16x32xf32> to vector<4x32xf32>
    %167 = vector.extract_strided_slice %163 {offsets = [12, 0], sizes = [4, 32], strides = [1, 1]} : vector<16x32xf32> to vector<4x32xf32>
    %168 = tpu.concatenate %164, %165, %166, %167 in 1 : vector<4x32xf32>, vector<4x32xf32>, vector<4x32xf32>, vector<4x32xf32> -> vector<4x128xf32>
    %c0_45 = arith.constant 0 : index
    %c0_46 = arith.constant 0 : index
    %169 = vector.load %arg9[%c0_45, %c0_46] : memref<4x128xf32, #tpu.memory_space<vmem>>, vector<4x128xf32>
    tpu.vector_store %arg9[%c0_45, %c0_46], %168 {strides = array<i32>} : memref<4x128xf32, #tpu.memory_space<vmem>>, vector<4x128xf32>,
    return
  }
}

</mosaic_0001>

<llo_original>
// kernel: tpu_custom_call.1
$region0: #{tpu_custom_call.1}
  #allocation0 [shape = 'u32[]', space=smem, size = 0x4, offset = 0x4, fixed_abs, tag = 'smem constant byte address 0x4 - core index']
  #allocation1 [shape = 'u32[144,128]{1,0:T(1,128)}', space=vmem, size = 0x12000, scoped, tag = 'internal scratch']
  %s0 = inlined_call_operand.vmem [shape: s32[16,1], index: 0, kind: input, shape index: {}]
  %s1 = inlined_call_operand.vmem [shape: f32[16,16], index: 1, kind: input, shape index: {}]
  %s2 = inlined_call_operand.vmem [shape: f32[128,32], index: 2, kind: input, shape index: {}]
  %s3 = inlined_call_operand.vmem [shape: f32[8,32], index: 3, kind: input, shape index: {}]
  %s4 = inlined_call_operand.vmem [shape: bf16[32,96], index: 4, kind: input, shape index: {}]
  %s5 = inlined_call_operand.vmem [shape: bf16[32,32], index: 5, kind: input, shape index: {}]
  %s6 = inlined_call_operand.vmem [shape: bf16[32,64], index: 6, kind: input, shape index: {}]
  %s7 = inlined_call_operand.vmem [shape: bf16[64,32], index: 7, kind: input, shape index: {}]
  %s8 = inlined_call_operand.vmem [shape: f32[8,128], index: 8, kind: input, shape index: {}]
  %s9 = inlined_call_operand.hbm [shape: f32[4,128], index: 9, kind: output, shape index: {}]
  %s10 = sld [smem:[#allocation0]]
  $region46: #{tpu_custom_call.1} parent=0
    _
  %s12 = ssub.s32 1, %s10
  %s13 = scalar_select 0, %s12, %s10
  $region1: #{tpu_custom_call.1} parent=0
    #allocation2 [shape = 'u8[2048]{0}', space=vmem, size = 0x800, scoped, tag = 'output window, operand 0, single buffered']
    #allocation3 [shape = 's32[1]{0}', space=sflag, size = 0x4, scoped, tag = 'scoped memory for tpu_custom_call.1']
    %14 = vsyncpa [#allocation3], 0
    // Predicated region
    $region2: #{tpu_custom_call.1} parent=1 // pred_check
      _
    $region3: #{tpu_custom_call.1} parent=1 // pred_check_branch
      %16 = sbr.rel (0) target = $region5
    $region4: #{tpu_custom_call.1} parent=1 // pred_region
      _
    $region5: #{tpu_custom_call.1} parent=1 // pred_fallthru
      _
    // Predicated region
    $region6: #{tpu_custom_call.1} parent=1 // pred_check
      _
    $region7: #{tpu_custom_call.1} parent=1 // pred_check_branch
      %18 = sbr.rel (0) target = $region9
    $region8: #{tpu_custom_call.1} parent=1 // pred_region
      _
    $region9: #{tpu_custom_call.1} parent=1 // pred_fallthru
      _
    // Predicated region
    $region10: #{tpu_custom_call.1} parent=1 // pred_check
      _
    $region11: #{tpu_custom_call.1} parent=1 // pred_check_branch
      %20 = sbr.rel (0) target = $region13
    $region12: #{tpu_custom_call.1} parent=1 // pred_region
      _
    $region13: #{tpu_custom_call.1} parent=1 // pred_fallthru
      _
    // Predicated region
    $region14: #{tpu_custom_call.1} parent=1 // pred_check
      _
    $region15: #{tpu_custom_call.1} parent=1 // pred_check_branch
      %22 = sbr.rel (0) target = $region17
    $region16: #{tpu_custom_call.1} parent=1 // pred_region
      _
    $region17: #{tpu_custom_call.1} parent=1 // pred_fallthru
      _
    // Predicated region
    $region18: #{tpu_custom_call.1} parent=1 // pred_check
      _
    $region19: #{tpu_custom_call.1} parent=1 // pred_check_branch
      %24 = sbr.rel (0) target = $region21
    $region20: #{tpu_custom_call.1} parent=1 // pred_region
      _
    $region21: #{tpu_custom_call.1} parent=1 // pred_fallthru
      _
    // Predicated region
    $region22: #{tpu_custom_call.1} parent=1 // pred_check
      _
    $region23: #{tpu_custom_call.1} parent=1 // pred_check_branch
      %26 = sbr.rel (0) target = $region25
    $region24: #{tpu_custom_call.1} parent=1 // pred_region
      _
    $region25: #{tpu_custom_call.1} parent=1 // pred_fallthru
      _
    // Predicated region
    $region26: #{tpu_custom_call.1} parent=1 // pred_check
      _
    $region27: #{tpu_custom_call.1} parent=1 // pred_check_branch
      %28 = sbr.rel (0) target = $region29
    $region28: #{tpu_custom_call.1} parent=1 // pred_region
      _
    $region29: #{tpu_custom_call.1} parent=1 // pred_fallthru
      _
    // Predicated region
    $region30: #{tpu_custom_call.1} parent=1 // pred_check
      _
    $region31: #{tpu_custom_call.1} parent=1 // pred_check_branch
      %30 = sbr.rel (0) target = $region33
    $region32: #{tpu_custom_call.1} parent=1 // pred_region
      _
    $region33: #{tpu_custom_call.1} parent=1 // pred_fallthru
      _
    // Predicated region
    $region34: #{tpu_custom_call.1} parent=1 // pred_check
      _
    $region35: #{tpu_custom_call.1} parent=1 // pred_check_branch
      %32 = sbr.rel (0) target = $region37
    $region36: #{tpu_custom_call.1} parent=1 // pred_region
      _
    $region37: #{tpu_custom_call.1} parent=1 // pred_fallthru
      _
    %v34 = vld [vmem:[%s8] sm:$0xff]
    %v35 = vld [vmem:[%s0] sm:$0xff]
    %v36 = vld [vmem:[%s0 + $0x8] sm:$0xff]
    %v37 = vlaneseq
    %v38 = vand.u32 %v37, 127
    %39 = vset.pattern.permute.xlu0 0
    %40 = vperm.xlu0 %39, %v35
    %v41 = vpop.permute.xlu0 %40
    %42 = vset.pattern.permute.xlu0 0
    %43 = vperm.xlu0 %42, %v36
    %v44 = vpop.permute.xlu0 %43
    %vm45 = vcmp.eq.s32.totalorder %v38, %v41
    %vm46 = vcmp.eq.s32.totalorder %v38, %v44
    %v47 = vsel %vm45, 1, 0
    %v48 = vsel %vm46, 1, 0
    %v49 = vcvt.s32.f32 %v47
    %v50 = vcvt.s32.f32 %v48
    %v51 = vpack.c.bf16 %v50, %v49
    %v52 = vld [vmem:[%s2] sm:$0xff]
    %v53 = vld [vmem:[%s2 + $0x8] sm:$0xff]
    %v54 = vld [vmem:[%s2 + $0x10] sm:$0xff]
    %v55 = vld [vmem:[%s2 + $0x18] sm:$0xff]
    %v56 = vld [vmem:[%s2 + $0x20] sm:$0xff]
    %v57 = vld [vmem:[%s2 + $0x28] sm:$0xff]
    %v58 = vld [vmem:[%s2 + $0x30] sm:$0xff]
    %v59 = vld [vmem:[%s2 + $0x38] sm:$0xff]
    %v60 = vld [vmem:[%s2 + $0x40] sm:$0xff]
    %v61 = vld [vmem:[%s2 + $0x48] sm:$0xff]
    %v62 = vld [vmem:[%s2 + $0x50] sm:$0xff]
    %v63 = vld [vmem:[%s2 + $0x58] sm:$0xff]
    %v64 = vld [vmem:[%s2 + $0x60] sm:$0xff]
    %v65 = vld [vmem:[%s2 + $0x68] sm:$0xff]
    %v66 = vld [vmem:[%s2 + $0x70] sm:$0xff]
    %v67 = vld [vmem:[%s2 + $0x78] sm:$0xff]
    %v68 = vpack.c.bf16 %v53, %v52
    %v69 = vpack.c.bf16 %v55, %v54
    %v70 = vpack.c.bf16 %v57, %v56
    %v71 = vpack.c.bf16 %v59, %v58
    %v72 = vpack.c.bf16 %v61, %v60
    %v73 = vpack.c.bf16 %v63, %v62
    %v74 = vpack.c.bf16 %v65, %v64
    %v75 = vpack.c.bf16 %v67, %v66
    %v76 = vld [vmem:[%s3] sm:$0xff]
    %77 = vmatprep.subr.bf16.mxu0 0
    %78 = vmatpush1.bf16.msra.mxu0 %v75
    %79 = vmatprep.subr.bf16.mxu0 0
    %80 = vmatpush1.bf16.msra.mxu0 %v74
    %81 = vmatprep.subr.bf16.mxu0 0
    %82 = vmatpush1.bf16.msra.mxu0 %v73
    %83 = vmatprep.subr.bf16.mxu0 0
    %84 = vmatpush1.bf16.msra.mxu0 %v72
    %85 = vmatprep.subr.bf16.mxu0 0
    %86 = vmatpush1.bf16.msra.mxu0 %v71
    %87 = vmatprep.subr.bf16.mxu0 0
    %88 = vmatpush1.bf16.msra.mxu0 %v70
    %89 = vmatprep.subr.bf16.mxu0 0
    %90 = vmatpush1.bf16.msra.mxu0 %v69
    %91 = vmatprep.subr.bf16.mxu0 0
    %92 = vmatpush1.bf16.msra.mxu0 %v68
    %93 = vmatprep.subr.bf16.mxu0 0
    %94 = vmatpush2.bf16.msra.mxu0 0
    %95 = vmatprep.subr.bf16.mxu0 0
    %96 = vmatpush2.bf16.msra.mxu0 0
    %97 = vmatprep.subr.bf16.mxu0 0
    %98 = vmatpush2.bf16.msra.mxu0 0
    %99 = vmatprep.subr.bf16.mxu0 0
    %100 = vmatpush2.bf16.msra.mxu0 0
    %101 = vmatprep.subr.bf16.mxu0 0
    %102 = vmatpush2.bf16.msra.mxu0 0
    %103 = vmatprep.subr.bf16.mxu0 0
    %104 = vmatpush2.bf16.msra.mxu0 0
    %105 = vmatprep.subr.bf16.mxu0 0
    %106 = vmatpush2.bf16.msra.mxu0 0
    %107 = vmatprep.subr.bf16.mxu0 0
    %108 = vmatpush2.bf16.msra.mxu0 0
    %109 = vmatprep.mubr.bf16.mxu0 0
    %110 = vmatmul.mubr.bf16.gmra.mxu0 %v51
    %v111 = vpop.f32.mrf.mxu0
    %v112 = vadd.f32 %v76, %v111
    %v113 = vpop.f32.mrf.mxu0
    %v114 = vpop.f32.mrf.mxu0
    %v115 = vadd.f32 %v76, %v114
    %v116 = vpop.f32.mrf.mxu0
    %117 = vdwg.mxu0
    %v118 = vpack.c.bf16 %v115, %v112
    %v119 = vld [vmem:[%s4] sm:$0xf]
    %v120 = vld [vmem:[%s4 + $0x4] sm:$0xf]
    %v121 = vld [vmem:[%s4 + $0x8] sm:$0xf]
    %v122 = vld [vmem:[%s4 + $0xc] sm:$0xf]
    %v123 = vlaneseq
    %v124 = vshrl.u32 %v123, 7
    %v125 = vsub.s32 0, %v124
    %v126 = vrot.slane %v34, %v125
    %v131 = vunpack.c.l.b16 %v119
    %v132 = vunpack.c.l.b16 %v120
    %v133 = vunpack.c.l.b16 %v121
    %v134 = vunpack.c.l.b16 %v122
    %v135 = vpack.c.b16 %v132, %v131
    %v136 = vpack.c.b16 %v134, %v133
    %vm139 = vcmask 261120
    %v141 = vsel %vm139, %v118, 0
    %143 = vmatprep.subr.bf16.mxu0 0
    %144 = vmatpush1.bf16.msra.mxu0 0
    %145 = vmatprep.subr.bf16.mxu0 0
    %146 = vmatpush1.bf16.msra.mxu0 0
    %147 = vmatprep.subr.bf16.mxu0 0
    %148 = vmatpush1.bf16.msra.mxu0 0
    %149 = vmatprep.subr.bf16.mxu0 0
    %150 = vmatpush1.bf16.msra.mxu0 0
    %151 = vmatprep.subr.bf16.mxu0 0
    %152 = vmatpush1.bf16.msra.mxu0 0
    %153 = vmatprep.subr.bf16.mxu0 0
    %154 = vmatpush1.bf16.msra.mxu0 0
    %155 = vmatprep.subr.bf16.mxu0 0
    %156 = vmatpush1.bf16.msra.mxu0 %v136
    %157 = vmatprep.subr.bf16.mxu0 0
    %158 = vmatpush1.bf16.msra.mxu0 %v135
    %159 = vmatprep.subr.bf16.mxu0 0
    %160 = vmatpush2.bf16.msra.mxu0 0
    %161 = vmatprep.subr.bf16.mxu0 0
    %162 = vmatpush2.bf16.msra.mxu0 0
    %163 = vmatprep.subr.bf16.mxu0 0
    %164 = vmatpush2.bf16.msra.mxu0 0
    %165 = vmatprep.subr.bf16.mxu0 0
    %166 = vmatpush2.bf16.msra.mxu0 0
    %167 = vmatprep.subr.bf16.mxu0 0
    %168 = vmatpush2.bf16.msra.mxu0 0
    %169 = vmatprep.subr.bf16.mxu0 0
    %170 = vmatpush2.bf16.msra.mxu0 0
    %171 = vmatprep.subr.bf16.mxu0 0
    %172 = vmatpush2.bf16.msra.mxu0 0
    %173 = vmatprep.subr.bf16.mxu0 0
    %174 = vmatpush2.bf16.msra.mxu0 0
    %175 = vmatprep.mubr.bf16.mxu0 0
    %176 = vmatmul.mubr.bf16.gmra.mxu0 %v141
    %v177 = vpop.f32.mrf.mxu0
    %v178 = vadd.f32 %v126, %v177
    %v179 = vpop.f32.mrf.mxu0
    %v180 = vpop.f32.mrf.mxu0
    %v181 = vadd.f32 %v126, %v180
    %v182 = vpop.f32.mrf.mxu0
    %183 = vdwg.mxu0
    %v184 = vpack.c.bf16 %v181, %v178
    %v185 = vld [vmem:[%s1] sm:$0xff]
    %v186 = vld [vmem:[%s1 + $0x8] sm:$0xff]
    %vm187 = vcmp.ge.s32.totalorder %v38, 0
    %vm188 = vcmp.lt.s32.totalorder %v38, 16
    %vm189 = vmand %vm187, %vm188
    %v190 = vsel %vm189, 1, 0
    %v191 = vcvt.s32.f32 %v190
    %v192 = vmul.f32 %v178, %v191
    %v193 = vmul.f32 %v181, %v191
    %v194 = vpack.c.bf16 %v193, %v192
    %196 = vrot.lane.b32.xlu0 %v184, 96
    %v197 = vpop.permute.xlu0 %196
    %v199 = vsel %vm139, %v194, 0
    %v202 = vsel %vm139, %v197, 0
    %204 = vmatprep.subr.bf16.mxu0 0
    %205 = vmatpush1.bf16.xpose.msra.mxu0 0
    %206 = vmatprep.subr.bf16.mxu0 0
    %207 = vmatpush1.bf16.xpose.msra.mxu0 0
    %208 = vmatprep.subr.bf16.mxu0 0
    %209 = vmatpush1.bf16.xpose.msra.mxu0 0
    %210 = vmatprep.subr.bf16.mxu0 0
    %211 = vmatpush1.bf16.xpose.msra.mxu0 0
    %212 = vmatprep.subr.bf16.mxu0 0
    %213 = vmatpush1.bf16.xpose.msra.mxu0 0
    %214 = vmatprep.subr.bf16.mxu0 0
    %215 = vmatpush1.bf16.xpose.msra.mxu0 0
    %216 = vmatprep.subr.bf16.mxu0 0
    %217 = vmatpush1.bf16.xpose.msra.mxu0 0
    %218 = vmatprep.subr.bf16.mxu0 0
    %219 = vmatpush1.bf16.xpose.msra.mxu0 %v202
    %220 = vmatprep.subr.bf16.mxu0 0
    %221 = vmatpush2.bf16.xpose.msra.mxu0 0
    %222 = vmatprep.subr.bf16.mxu0 0
    %223 = vmatpush2.bf16.xpose.msra.mxu0 0
    %224 = vmatprep.subr.bf16.mxu0 0
    %225 = vmatpush2.bf16.xpose.msra.mxu0 0
    %226 = vmatprep.subr.bf16.mxu0 0
    %227 = vmatpush2.bf16.xpose.msra.mxu0 0
    %228 = vmatprep.subr.bf16.mxu0 0
    %229 = vmatpush2.bf16.xpose.msra.mxu0 0
    %230 = vmatprep.subr.bf16.mxu0 0
    %231 = vmatpush2.bf16.xpose.msra.mxu0 0
    %232 = vmatprep.subr.bf16.mxu0 0
    %233 = vmatpush2.bf16.xpose.msra.mxu0 0
    %234 = vmatprep.subr.bf16.mxu0 0
    %235 = vmatpush2.bf16.xpose.msra.mxu0 0
    %236 = vmatprep.mubr.bf16.mxu0 0
    %237 = vmatmul.mubr.bf16.gmra.mxu0 %v199
    %v238 = vpop.f32.mrf.mxu0
    %v239 = vadd.f32 %v185, %v238
    %v240 = vpop.f32.mrf.mxu0
    %v241 = vpop.f32.mrf.mxu0
    %v242 = vadd.f32 %v186, %v241
    %v243 = vpop.f32.mrf.mxu0
    %244 = vdwg.mxu0
    %vm245 = vcmask 130048
    %v246 = vsel %vm245, %v239, -inf
    %247 = vmax.xlane.f32.xlu0 %v246
    %v248 = vpop.xlane.xlu0 %247
    %v249 = vsel %vm245, %v242, -inf
    %250 = vmax.xlane.f32.xlu0 %v249
    %v251 = vpop.xlane.xlu0 %250
    %v252 = vsub.f32 %v239, %v248
    %v253 = vsub.f32 %v242, %v251
    %v254 = vmul.f32 %v252, 1.442695
    %v255 = vpow.pop %v254
    %v256 = vmul.f32 %v253, 1.442695
    %v257 = vpow.pop %v256
    %v258 = vsel %vm245, %v255, 0.0
    %259 = vadd.xlane.f32.xlu0 %v258
    %v260 = vpop.xlane.xlu0 %259
    %v261 = vsel %vm245, %v257, 0.0
    %262 = vadd.xlane.f32.xlu0 %v261
    %v263 = vpop.xlane.xlu0 %262
    %v264 = vrcp.pop %v260
    %v265 = vrcp.pop %v263
    %v266 = vmul.f32 %v255, %v264
    %v267 = vmul.f32 %v257, %v265
    %269 = vrot.lane.b32.xlu0 %v191, 64
    %v270 = vpop.permute.xlu0 %269
    %v272 = vmul.f32 %v178, %v270
    %v273 = vmul.f32 %v181, %v270
    %v274 = vpack.c.bf16 %v273, %v272
    %v275 = vpack.c.bf16 %v267, %v266
    %vm276 = vcmp.ge.s32.totalorder %v38, 16
    %vm277 = vcmp.lt.s32.totalorder %v38, 32
    %vm278 = vmand %vm276, %vm277
    %v279 = vsel %vm278, 1, 0
    %v280 = vcvt.s32.f32 %v279
    %v281 = vmul.f32 %v178, %v280
    %v282 = vmul.f32 %v181, %v280
    %v283 = vpack.c.bf16 %v282, %v281
    %v285 = vsel %vm139, %v283, 0
    %287 = vmatprep.subr.bf16.mxu0 0
    %288 = vmatpush1.bf16.xpose.msra.mxu0 0
    %289 = vmatprep.subr.bf16.mxu0 0
    %290 = vmatpush1.bf16.xpose.msra.mxu0 0
    %291 = vmatprep.subr.bf16.mxu0 0
    %292 = vmatpush1.bf16.xpose.msra.mxu0 0
    %293 = vmatprep.subr.bf16.mxu0 0
    %294 = vmatpush1.bf16.xpose.msra.mxu0 0
    %295 = vmatprep.subr.bf16.mxu0 0
    %296 = vmatpush1.bf16.xpose.msra.mxu0 0
    %297 = vmatprep.subr.bf16.mxu0 0
    %298 = vmatpush1.bf16.xpose.msra.mxu0 0
    %299 = vmatprep.subr.bf16.mxu0 0
    %300 = vmatpush1.bf16.xpose.msra.mxu0 0
    %301 = vmatprep.subr.bf16.mxu0 0
    %302 = vmatpush1.bf16.xpose.msra.mxu0 %v202
    %303 = vmatprep.subr.bf16.mxu0 0
    %304 = vmatpush2.bf16.xpose.msra.mxu0 0
    %305 = vmatprep.subr.bf16.mxu0 0
    %306 = vmatpush2.bf16.xpose.msra.mxu0 0
    %307 = vmatprep.subr.bf16.mxu0 0
    %308 = vmatpush2.bf16.xpose.msra.mxu0 0
    %309 = vmatprep.subr.bf16.mxu0 0
    %310 = vmatpush2.bf16.xpose.msra.mxu0 0
    %311 = vmatprep.subr.bf16.mxu0 0
    %312 = vmatpush2.bf16.xpose.msra.mxu0 0
    %313 = vmatprep.subr.bf16.mxu0 0
    %314 = vmatpush2.bf16.xpose.msra.mxu0 0
    %315 = vmatprep.subr.bf16.mxu0 0
    %316 = vmatpush2.bf16.xpose.msra.mxu0 0
    %317 = vmatprep.subr.bf16.mxu0 0
    %318 = vmatpush2.bf16.xpose.msra.mxu0 0
    %319 = vmatprep.mubr.bf16.mxu0 0
    %320 = vmatmul.mubr.bf16.gmra.mxu0 %v285
    %v321 = vpop.f32.mrf.mxu0
    %v322 = vadd.f32 %v185, %v321
    %v323 = vpop.f32.mrf.mxu0
    %v324 = vpop.f32.mrf.mxu0
    %v325 = vadd.f32 %v186, %v324
    %v326 = vpop.f32.mrf.mxu0
    %327 = vdwg.mxu0
    %v328 = vsel %vm245, %v322, -inf
    %329 = vmax.xlane.f32.xlu0 %v328
    %v330 = vpop.xlane.xlu0 %329
    %v331 = vsel %vm245, %v325, -inf
    %332 = vmax.xlane.f32.xlu0 %v331
    %v333 = vpop.xlane.xlu0 %332
    %v334 = vsub.f32 %v322, %v330
    %v335 = vsub.f32 %v325, %v333
    %v336 = vmul.f32 %v334, 1.442695
    %v337 = vpow.pop %v336
    %v338 = vmul.f32 %v335, 1.442695
    %v339 = vpow.pop %v338
    %v340 = vsel %vm245, %v337, 0.0
    %341 = vadd.xlane.f32.xlu0 %v340
    %v342 = vpop.xlane.xlu0 %341
    %v343 = vsel %vm245, %v339, 0.0
    %344 = vadd.xlane.f32.xlu0 %v343
    %v345 = vpop.xlane.xlu0 %344
    %v346 = vrcp.pop %v342
    %v347 = vrcp.pop %v345
    %v348 = vmul.f32 %v337, %v346
    %v349 = vmul.f32 %v339, %v347
    %351 = vrot.lane.b32.xlu0 %v280, 64
    %v352 = vpop.permute.xlu0 %351
    %v354 = vmul.f32 %v178, %v352
    %v355 = vmul.f32 %v181, %v352
    %v356 = vpack.c.bf16 %v355, %v354
    %v357 = vpack.c.bf16 %v349, %v348
    %359 = vrot.lane.b32.xlu0 %v356, 64
    %v360 = vpop.permute.xlu0 %359
    %v363 = vsel %vm245, %v357, 0
    %365 = vmatprep.subr.bf16.mxu0 0
    %366 = vmatpush1.bf16.msra.mxu0 0
    %367 = vmatprep.subr.bf16.mxu0 0
    %368 = vmatpush1.bf16.msra.mxu0 0
    %369 = vmatprep.subr.bf16.mxu0 0
    %370 = vmatpush1.bf16.msra.mxu0 0
    %371 = vmatprep.subr.bf16.mxu0 0
    %372 = vmatpush1.bf16.msra.mxu0 0
    %373 = vmatprep.subr.bf16.mxu0 0
    %374 = vmatpush1.bf16.msra.mxu0 0
    %375 = vmatprep.subr.bf16.mxu0 0
    %376 = vmatpush1.bf16.msra.mxu0 0
    %377 = vmatprep.subr.bf16.mxu0 0
    %378 = vmatpush1.bf16.msra.mxu0 0
    %379 = vmatprep.subr.bf16.mxu0 0
    %380 = vmatpush1.bf16.msra.mxu0 %v360
    %381 = vmatprep.subr.bf16.mxu0 0
    %382 = vmatpush2.bf16.msra.mxu0 0
    %383 = vmatprep.subr.bf16.mxu0 0
    %384 = vmatpush2.bf16.msra.mxu0 0
    %385 = vmatprep.subr.bf16.mxu0 0
    %386 = vmatpush2.bf16.msra.mxu0 0
    %387 = vmatprep.subr.bf16.mxu0 0
    %388 = vmatpush2.bf16.msra.mxu0 0
    %389 = vmatprep.subr.bf16.mxu0 0
    %390 = vmatpush2.bf16.msra.mxu0 0
    %391 = vmatprep.subr.bf16.mxu0 0
    %392 = vmatpush2.bf16.msra.mxu0 0
    %393 = vmatprep.subr.bf16.mxu0 0
    %394 = vmatpush2.bf16.msra.mxu0 0
    %395 = vmatprep.subr.bf16.mxu0 0
    %396 = vmatpush2.bf16.msra.mxu0 0
    %397 = vmatprep.mubr.bf16.mxu0 0
    %398 = vmatmul.mubr.bf16.gmra.mxu0 %v363
    %v399 = vpop.f32.mrf.mxu0
    %v400 = vadd.f32 0.0, %v399
    %v401 = vpop.f32.mrf.mxu0
    %v402 = vpop.f32.mrf.mxu0
    %v403 = vadd.f32 0.0, %v402
    %v404 = vpop.f32.mrf.mxu0
    %405 = vdwg.mxu0
    %407 = vrot.lane.b32.xlu0 %v274, 64
    %v408 = vpop.permute.xlu0 %407
    %v411 = vsel %vm245, %v275, 0
    %413 = vmatprep.subr.bf16.mxu0 0
    %414 = vmatpush1.bf16.msra.mxu0 0
    %415 = vmatprep.subr.bf16.mxu0 0
    %416 = vmatpush1.bf16.msra.mxu0 0
    %417 = vmatprep.subr.bf16.mxu0 0
    %418 = vmatpush1.bf16.msra.mxu0 0
    %419 = vmatprep.subr.bf16.mxu0 0
    %420 = vmatpush1.bf16.msra.mxu0 0
    %421 = vmatprep.subr.bf16.mxu0 0
    %422 = vmatpush1.bf16.msra.mxu0 0
    %423 = vmatprep.subr.bf16.mxu0 0
    %424 = vmatpush1.bf16.msra.mxu0 0
    %425 = vmatprep.subr.bf16.mxu0 0
    %426 = vmatpush1.bf16.msra.mxu0 0
    %427 = vmatprep.subr.bf16.mxu0 0
    %428 = vmatpush1.bf16.msra.mxu0 %v408
    %429 = vmatprep.subr.bf16.mxu0 0
    %430 = vmatpush2.bf16.msra.mxu0 0
    %431 = vmatprep.subr.bf16.mxu0 0
    %432 = vmatpush2.bf16.msra.mxu0 0
    %433 = vmatprep.subr.bf16.mxu0 0
    %434 = vmatpush2.bf16.msra.mxu0 0
    %435 = vmatprep.subr.bf16.mxu0 0
    %436 = vmatpush2.bf16.msra.mxu0 0
    %437 = vmatprep.subr.bf16.mxu0 0
    %438 = vmatpush2.bf16.msra.mxu0 0
    %439 = vmatprep.subr.bf16.mxu0 0
    %440 = vmatpush2.bf16.msra.mxu0 0
    %441 = vmatprep.subr.bf16.mxu0 0
    %442 = vmatpush2.bf16.msra.mxu0 0
    %443 = vmatprep.subr.bf16.mxu0 0
    %444 = vmatpush2.bf16.msra.mxu0 0
    %445 = vmatprep.mubr.bf16.mxu0 0
    %446 = vmatmul.mubr.bf16.gmra.mxu0 %v411
    %v447 = vpop.f32.mrf.mxu0
    %v448 = vadd.f32 %v400, %v447
    %v449 = vpop.f32.mrf.mxu0
    %v450 = vpop.f32.mrf.mxu0
    %v451 = vadd.f32 %v403, %v450
    %v452 = vpop.f32.mrf.mxu0
    %453 = vdwg.mxu0
    %v454 = vpack.c.bf16 %v451, %v448
    %v455 = vld [vmem:[%s5] sm:$0xf]
    %v456 = vld [vmem:[%s5 + $0x4] sm:$0xf]
    %v457 = vld [vmem:[%s5 + $0x8] sm:$0xf]
    %v458 = vld [vmem:[%s5 + $0xc] sm:$0xf]
    %v459 = vlaneseq
    %v460 = vshrl.u32 %v459, 7
    %v461 = vsub.s32 1, %v460
    %v462 = vrot.slane %v34, %v461
    %v467 = vunpack.c.l.b16 %v455
    %v468 = vunpack.c.l.b16 %v456
    %v469 = vunpack.c.l.b16 %v457
    %v470 = vunpack.c.l.b16 %v458
    %v471 = vpack.c.b16 %v468, %v467
    %v472 = vpack.c.b16 %v470, %v469
    %v476 = vsel %vm139, %v454, 0
    %478 = vmatprep.subr.bf16.mxu0 0
    %479 = vmatpush1.bf16.msra.mxu0 0
    %480 = vmatprep.subr.bf16.mxu0 0
    %481 = vmatpush1.bf16.msra.mxu0 0
    %482 = vmatprep.subr.bf16.mxu0 0
    %483 = vmatpush1.bf16.msra.mxu0 0
    %484 = vmatprep.subr.bf16.mxu0 0
    %485 = vmatpush1.bf16.msra.mxu0 0
    %486 = vmatprep.subr.bf16.mxu0 0
    %487 = vmatpush1.bf16.msra.mxu0 0
    %488 = vmatprep.subr.bf16.mxu0 0
    %489 = vmatpush1.bf16.msra.mxu0 0
    %490 = vmatprep.subr.bf16.mxu0 0
    %491 = vmatpush1.bf16.msra.mxu0 %v472
    %492 = vmatprep.subr.bf16.mxu0 0
    %493 = vmatpush1.bf16.msra.mxu0 %v471
    %494 = vmatprep.subr.bf16.mxu0 0
    %495 = vmatpush2.bf16.msra.mxu0 0
    %496 = vmatprep.subr.bf16.mxu0 0
    %497 = vmatpush2.bf16.msra.mxu0 0
    %498 = vmatprep.subr.bf16.mxu0 0
    %499 = vmatpush2.bf16.msra.mxu0 0
    %500 = vmatprep.subr.bf16.mxu0 0
    %501 = vmatpush2.bf16.msra.mxu0 0
    %502 = vmatprep.subr.bf16.mxu0 0
    %503 = vmatpush2.bf16.msra.mxu0 0
    %504 = vmatprep.subr.bf16.mxu0 0
    %505 = vmatpush2.bf16.msra.mxu0 0
    %506 = vmatprep.subr.bf16.mxu0 0
    %507 = vmatpush2.bf16.msra.mxu0 0
    %508 = vmatprep.subr.bf16.mxu0 0
    %509 = vmatpush2.bf16.msra.mxu0 0
    %510 = vmatprep.mubr.bf16.mxu0 0
    %511 = vmatmul.mubr.bf16.gmra.mxu0 %v476
    %v512 = vpop.f32.mrf.mxu0
    %v513 = vadd.f32 %v462, %v512
    %v514 = vpop.f32.mrf.mxu0
    %v515 = vpop.f32.mrf.mxu0
    %v516 = vadd.f32 %v462, %v515
    %v517 = vpop.f32.mrf.mxu0
    %518 = vdwg.mxu0
    %v519 = vadd.f32 %v112, %v513
    %v520 = vadd.f32 %v115, %v516
    %v521 = vsel %vm139, %v519, 0.0
    %522 = vadd.xlane.f32.xlu0 %v521
    %v523 = vpop.xlane.xlu0 %522
    %v524 = vsel %vm139, %v520, 0.0
    %525 = vadd.xlane.f32.xlu0 %v524
    %v526 = vpop.xlane.xlu0 %525
    %v527 = vrcp.pop 32.0
    %v528 = vmul.f32 %v523, %v527
    %v529 = vmul.f32 %v526, %v527
    %v530 = vsub.f32 %v519, %v528
    %v531 = vsub.f32 %v520, %v529
    %v532 = vmul.f32 %v530, %v530
    %v533 = vmul.f32 %v531, %v531
    %v534 = vsel %vm139, %v532, 0.0
    %535 = vadd.xlane.f32.xlu0 %v534
    %v536 = vpop.xlane.xlu0 %535
    %v537 = vsel %vm139, %v533, 0.0
    %538 = vadd.xlane.f32.xlu0 %v537
    %v539 = vpop.xlane.xlu0 %538
    %v540 = vmul.f32 %v536, %v527
    %v541 = vmul.f32 %v539, %v527
    %v542 = vadd.f32 %v540, 1e-05
    %v543 = vadd.f32 %v541, 1e-05
    %v544 = vrsqrt.pop %v542
    %v545 = vrsqrt.pop %v543
    %v546 = vmul.f32 %v530, %v544
    %v547 = vmul.f32 %v531, %v545
    %v548 = vlaneseq
    %v549 = vshrl.u32 %v548, 7
    %v550 = vsub.s32 2, %v549
    %v551 = vrot.slane %v34, %v550
    %v552 = vmul.f32 %v546, %v551
    %v553 = vmul.f32 %v547, %v551
    %v554 = vlaneseq
    %v555 = vshrl.u32 %v554, 7
    %v556 = vsub.s32 3, %v555
    %v557 = vrot.slane %v34, %v556
    %v558 = vadd.f32 %v552, %v557
    %v559 = vadd.f32 %v553, %v557
    %v560 = vpack.c.bf16 %v559, %v558
    %v561 = vld [vmem:[%s6] sm:$0xf]
    %v562 = vld [vmem:[%s6 + $0x4] sm:$0xf]
    %v563 = vld [vmem:[%s6 + $0x8] sm:$0xf]
    %v564 = vld [vmem:[%s6 + $0xc] sm:$0xf]
    %v565 = vlaneseq
    %v566 = vshrl.u32 %v565, 7
    %v567 = vsub.s32 4, %v566
    %v568 = vrot.slane %v34, %v567
    %v573 = vunpack.c.l.b16 %v561
    %v574 = vunpack.c.l.b16 %v562
    %v575 = vunpack.c.l.b16 %v563
    %v576 = vunpack.c.l.b16 %v564
    %v577 = vpack.c.b16 %v574, %v573
    %v578 = vpack.c.b16 %v576, %v575
    %v582 = vsel %vm139, %v560, 0
    %584 = vmatprep.subr.bf16.mxu0 0
    %585 = vmatpush1.bf16.msra.mxu0 0
    %586 = vmatprep.subr.bf16.mxu0 0
    %587 = vmatpush1.bf16.msra.mxu0 0
    %588 = vmatprep.subr.bf16.mxu0 0
    %589 = vmatpush1.bf16.msra.mxu0 0
    %590 = vmatprep.subr.bf16.mxu0 0
    %591 = vmatpush1.bf16.msra.mxu0 0
    %592 = vmatprep.subr.bf16.mxu0 0
    %593 = vmatpush1.bf16.msra.mxu0 0
    %594 = vmatprep.subr.bf16.mxu0 0
    %595 = vmatpush1.bf16.msra.mxu0 0
    %596 = vmatprep.subr.bf16.mxu0 0
    %597 = vmatpush1.bf16.msra.mxu0 %v578
    %598 = vmatprep.subr.bf16.mxu0 0
    %599 = vmatpush1.bf16.msra.mxu0 %v577
    %600 = vmatprep.subr.bf16.mxu0 0
    %601 = vmatpush2.bf16.msra.mxu0 0
    %602 = vmatprep.subr.bf16.mxu0 0
    %603 = vmatpush2.bf16.msra.mxu0 0
    %604 = vmatprep.subr.bf16.mxu0 0
    %605 = vmatpush2.bf16.msra.mxu0 0
    %606 = vmatprep.subr.bf16.mxu0 0
    %607 = vmatpush2.bf16.msra.mxu0 0
    %608 = vmatprep.subr.bf16.mxu0 0
    %609 = vmatpush2.bf16.msra.mxu0 0
    %610 = vmatprep.subr.bf16.mxu0 0
    %611 = vmatpush2.bf16.msra.mxu0 0
    %612 = vmatprep.subr.bf16.mxu0 0
    %613 = vmatpush2.bf16.msra.mxu0 0
    %614 = vmatprep.subr.bf16.mxu0 0
    %615 = vmatpush2.bf16.msra.mxu0 0
    %616 = vmatprep.mubr.bf16.mxu0 0
    %617 = vmatmul.mubr.bf16.gmra.mxu0 %v582
    %v618 = vpop.f32.mrf.mxu0
    %v619 = vadd.f32 %v568, %v618
    %v620 = vpop.f32.mrf.mxu0
    %v621 = vpop.f32.mrf.mxu0
    %v622 = vadd.f32 %v568, %v621
    %v623 = vpop.f32.mrf.mxu0
    %624 = vdwg.mxu0
    %v625 = vmul.f32 %v619, 0.5
    %v626 = vmul.f32 %v622, 0.5
    %v627 = vmul.f32 %v619, 0.044715
    %v628 = vmul.f32 %v622, 0.044715
    %v629 = vmul.f32 %v627, %v619
    %v630 = vmul.f32 %v628, %v622
    %v631 = vmul.f32 %v629, %v619
    %v632 = vmul.f32 %v630, %v622
    %v633 = vadd.f32 %v619, %v631
    %v634 = vadd.f32 %v622, %v632
    %v635 = vmul.f32 %v633, 0.7978846
    %v636 = vmul.f32 %v634, 0.7978846
    %v637 = vtanh.pop %v635
    %v638 = vtanh.pop %v636
    %v639 = vadd.f32 %v637, 1.0
    %v640 = vadd.f32 %v638, 1.0
    %v641 = vmul.f32 %v625, %v639
    %v642 = vmul.f32 %v626, %v640
    %v643 = vpack.c.bf16 %v642, %v641
    %v644 = vld [vmem:[%s7] sm:$0xf]
    %v645 = vld [vmem:[%s7 + $0x4] sm:$0xf]
    %v646 = vld [vmem:[%s7 + $0x8] sm:$0xf]
    %v647 = vld [vmem:[%s7 + $0xc] sm:$0xf]
    %v648 = vld [vmem:[%s7 + $0x10] sm:$0xf]
    %v649 = vld [vmem:[%s7 + $0x14] sm:$0xf]
    %v650 = vld [vmem:[%s7 + $0x18] sm:$0xf]
    %v651 = vld [vmem:[%s7 + $0x1c] sm:$0xf]
    %v652 = vlaneseq
    %v653 = vshrl.u32 %v652, 7
    %v654 = vsub.s32 5, %v653
    %v655 = vrot.slane %v34, %v654
    %v664 = vunpack.c.l.b16 %v644
    %v665 = vunpack.c.l.b16 %v645
    %v666 = vunpack.c.l.b16 %v646
    %v667 = vunpack.c.l.b16 %v647
    %v668 = vunpack.c.l.b16 %v648
    %v669 = vunpack.c.l.b16 %v649
    %v670 = vunpack.c.l.b16 %v650
    %v671 = vunpack.c.l.b16 %v651
    %v672 = vpack.c.b16 %v665, %v664
    %v673 = vpack.c.b16 %v667, %v666
    %v674 = vpack.c.b16 %v669, %v668
    %v675 = vpack.c.b16 %v671, %v670
    %vm680 = vcmask 523264
    %v682 = vsel %vm680, %v643, 0
    %684 = vmatprep.subr.bf16.mxu0 0
    %685 = vmatpush1.bf16.msra.mxu0 0
    %686 = vmatprep.subr.bf16.mxu0 0
    %687 = vmatpush1.bf16.msra.mxu0 0
    %688 = vmatprep.subr.bf16.mxu0 0
    %689 = vmatpush1.bf16.msra.mxu0 0
    %690 = vmatprep.subr.bf16.mxu0 0
    %691 = vmatpush1.bf16.msra.mxu0 0
    %692 = vmatprep.subr.bf16.mxu0 0
    %693 = vmatpush1.bf16.msra.mxu0 %v675
    %694 = vmatprep.subr.bf16.mxu0 0
    %695 = vmatpush1.bf16.msra.mxu0 %v674
    %696 = vmatprep.subr.bf16.mxu0 0
    %697 = vmatpush1.bf16.msra.mxu0 %v673
    %698 = vmatprep.subr.bf16.mxu0 0
    %699 = vmatpush1.bf16.msra.mxu0 %v672
    %700 = vmatprep.subr.bf16.mxu0 0
    %701 = vmatpush2.bf16.msra.mxu0 0
    %702 = vmatprep.subr.bf16.mxu0 0
    %703 = vmatpush2.bf16.msra.mxu0 0
    %704 = vmatprep.subr.bf16.mxu0 0
    %705 = vmatpush2.bf16.msra.mxu0 0
    %706 = vmatprep.subr.bf16.mxu0 0
    %707 = vmatpush2.bf16.msra.mxu0 0
    %708 = vmatprep.subr.bf16.mxu0 0
    %709 = vmatpush2.bf16.msra.mxu0 0
    %710 = vmatprep.subr.bf16.mxu0 0
    %711 = vmatpush2.bf16.msra.mxu0 0
    %712 = vmatprep.subr.bf16.mxu0 0
    %713 = vmatpush2.bf16.msra.mxu0 0
    %714 = vmatprep.subr.bf16.mxu0 0
    %715 = vmatpush2.bf16.msra.mxu0 0
    %716 = vmatprep.mubr.bf16.mxu0 0
    %717 = vmatmul.mubr.bf16.gmra.mxu0 %v682
    %v718 = vpop.f32.mrf.mxu0
    %v719 = vadd.f32 %v655, %v718
    %v720 = vpop.f32.mrf.mxu0
    %v721 = vpop.f32.mrf.mxu0
    %v722 = vadd.f32 %v655, %v721
    %v723 = vpop.f32.mrf.mxu0
    %724 = vdwg.mxu0
    %v725 = vadd.f32 %v558, %v719
    %v726 = vadd.f32 %v559, %v722
    %v727 = vsel %vm139, %v725, 0.0
    %728 = vadd.xlane.f32.xlu0 %v727
    %v729 = vpop.xlane.xlu0 %728
    %v730 = vsel %vm139, %v726, 0.0
    %731 = vadd.xlane.f32.xlu0 %v730
    %v732 = vpop.xlane.xlu0 %731
    %v733 = vmul.f32 %v729, %v527
    %v734 = vmul.f32 %v732, %v527
    %v735 = vsub.f32 %v725, %v733
    %v736 = vsub.f32 %v726, %v734
    %v737 = vmul.f32 %v735, %v735
    %v738 = vmul.f32 %v736, %v736
    %v739 = vsel %vm139, %v737, 0.0
    %740 = vadd.xlane.f32.xlu0 %v739
    %v741 = vpop.xlane.xlu0 %740
    %v742 = vsel %vm139, %v738, 0.0
    %743 = vadd.xlane.f32.xlu0 %v742
    %v744 = vpop.xlane.xlu0 %743
    %v745 = vmul.f32 %v741, %v527
    %v746 = vmul.f32 %v744, %v527
    %v747 = vadd.f32 %v745, 1e-05
    %v748 = vadd.f32 %v746, 1e-05
    %v749 = vrsqrt.pop %v747
    %v750 = vrsqrt.pop %v748
    %v751 = vmul.f32 %v735, %v749
    %v752 = vmul.f32 %v736, %v750
    %v753 = vlaneseq
    %v754 = vshrl.u32 %v753, 7
    %v755 = vsub.s32 6, %v754
    %v756 = vrot.slane %v34, %v755
    %v757 = vmul.f32 %v751, %v756
    %v758 = vmul.f32 %v752, %v756
    %v759 = vlaneseq
    %v760 = vshrl.u32 %v759, 7
    %v761 = vsub.s32 7, %v760
    %v762 = vrot.slane %v34, %v761
    %v763 = vadd.f32 %v757, %v762
    %v764 = vadd.f32 %v758, %v762
    %v766 = vrot.slane %v763, 4
    %767 = vrot.lane.b32.xlu0 %v766, 32
    %v768 = vpop.permute.xlu0 %767
    %771 = vrot.lane.b32.xlu0 %v764, 64
    %v772 = vpop.permute.xlu0 %771
    %v774 = vrot.slane %v764, 4
    %775 = vrot.lane.b32.xlu0 %v774, 96
    %v776 = vpop.permute.xlu0 %775
    %v778 = vsel %vm139, %v763, %v768
    %v779 = vsel %vm680, %v778, %v772
    %vm780 = vcmask 785408
    %v781 = vsel %vm780, %v779, %v776
    %782 = vst [vmem:[#allocation2] sm:$0xf] %v781
    // Predicated region
    $region38: #{tpu_custom_call.1} parent=1 // pred_check
      _
    $region39: #{tpu_custom_call.1} parent=1 // pred_check_branch
      %784 = sbr.rel (0) target = $region41
    $region40: #{tpu_custom_call.1} parent=1 // pred_region
      %s786 = ssub.s32 64, 64
      %787 = vsyncadd [#allocation3], %s786
      %s789 = sshll.u32 [#allocation2], 4
      %s790 = int_to_ptr.vmem [resolvable:$true] %s789
      %792 = dma.vmem_to_hbm [thread:$0]  %s790, 64, %s9, [#allocation3]
    $region41: #{tpu_custom_call.1} parent=1 // pred_fallthru
      _
    // Predicated region
    $region42: #{tpu_custom_call.1} parent=1 // pred_check
      _
    $region43: #{tpu_custom_call.1} parent=1 // pred_check_branch
      %794 = sbr.rel (0) target = $region45
    $region44: #{tpu_custom_call.1} parent=1 // pred_region
      %795 = dma.done [#allocation3], 64
    $region45: #{tpu_custom_call.1} parent=1 // pred_fallthru
      _
    %796 = vsyncpa [#allocation3], 1

</llo_original>
